<compile_context>
chip_gen: v7x
topology: tpu7x:2x2x1
jax: 0.10.0
libtpu: 0.0.40
codegen_flags: <defaults>
</compile_context>

<pallas_src>
import jax
import jax.numpy as jnp
import numpy as np
from jax import lax
from jax.experimental import pallas as pl
from jax.experimental.pallas import tpu as pltpu

# ---- problem configuration (small, deterministic) --------------------------
N = 2          # batch
C_IN = 4       # in_channels
C_OUT = 8      # out_channels
L = 16         # sequence length
K = 3          # kernel_size
PAD = 2        # padding
DIL = 2        # dilation
EPS = 1e-5     # BatchNorm1d default

L_PAD = L + 2 * PAD
L_OUT = L + 2 * PAD - DIL * (K - 1)   # stride = 1
NL = N * L_OUT                         # lane-dense output width


# ---- single fused kernel: one im2col matmul + BN (batch statistics) --------
def fused_conv_bn_kernel(p_ref, w_ref, gb_ref, o_ref):
    # p_ref  : (K*C_IN, N*L_OUT)  transposed im2col patches (built in the jit wrapper)
    # w_ref  : (C_OUT, K*C_IN)    conv weight, rows = out-channel, cols k-major / c-minor
    # gb_ref : (C_OUT, 2)         col 0 = BN gamma, col 1 = BN beta (merged operand)
    # o_ref  : (C_OUT, N*L_OUT)   lane-dense 2D output
    #
    # Single MXU push; no in-kernel concats / slices / per-batch loops.
    y = jnp.dot(w_ref[...], p_ref[...], preferred_element_type=jnp.float32)

    # BatchNorm1d, training-mode batch statistics over (N, L_OUT) == the lane axis.
    # Conv bias intentionally omitted: with batch statistics an additive per-channel
    # bias cancels exactly ((y + b) - mean(y + b) == y - mean(y)).
    # Two-pass variance (subtract mean first) avoids E[y^2]-E[y]^2 cancellation.
    inv_cnt = jnp.float32(1.0 / NL)
    mean = jnp.sum(y, axis=1, keepdims=True) * inv_cnt            # (C_OUT, 1)
    d = y - mean
    var = jnp.sum(d * d, axis=1, keepdims=True) * inv_cnt         # biased variance
    scale = gb_ref[:, 0:1] * lax.rsqrt(var + EPS)                 # rsqrt on the EUP
    o_ref[...] = (d * scale + gb_ref[:, 1:2]).astype(o_ref.dtype)


# ---- wrapper ---------------------------------------------------------------
@jax.jit
def one_d_conv_bn(x_ncl, w_oik, bias, gamma, beta):
    """x_ncl: (N, C_IN, L) float32. Returns (N, C_OUT, L_OUT) float32."""
    del bias  # exactly cancelled by training-mode BatchNorm (see kernel comment)

    # --- wrapper-side layout plumbing (all on <8 KiB arrays, zero FLOPs, fuses) ---
    # Transposed im2col: patches[k*C_IN + c, n*L_OUT + l] = x_pad[n, c, l + k*DIL]
    xp = jnp.pad(x_ncl, ((0, 0), (0, 0), (PAD, PAD)))             # (N, C_IN, L_PAD)
    taps = jnp.stack(
        [lax.slice_in_dim(xp, k * DIL, k * DIL + L_OUT, axis=2) for k in range(K)],
        axis=1)                                                   # (N, K, C_IN, L_OUT)
    patches = jnp.transpose(taps, (1, 2, 0, 3)).reshape(K * C_IN, N * L_OUT)

    # W2T[o, k*C_IN + c] = w[o, c, k]  -> matches the patch-row ordering above.
    w2t = jnp.transpose(w_oik, (0, 2, 1)).reshape(C_OUT, K * C_IN)
    gb = jnp.stack([gamma, beta], axis=1)                         # (C_OUT, 2)

    # Gridless call: whole arrays live in VMEM, no grid-step plumbing, one dispatch.
    out2d = pl.pallas_call(
        fused_conv_bn_kernel,
        out_shape=jax.ShapeDtypeStruct((C_OUT, N * L_OUT), jnp.float32),
        in_specs=[
            pl.BlockSpec(memory_space=pltpu.MemorySpace.VMEM),
            pl.BlockSpec(memory_space=pltpu.MemorySpace.VMEM),
            pl.BlockSpec(memory_space=pltpu.MemorySpace.VMEM),
        ],
        out_specs=pl.BlockSpec(memory_space=pltpu.MemorySpace.VMEM),
    )(patches, w2t, gb)

    # Lane-dense kernel output -> NCL layout (layout only, ~1 KiB, fuses in the jit).
    return jnp.transpose(out2d.reshape(C_OUT, N, L_OUT), (1, 0, 2))


# ---- pure-JAX reference (mirrors PyTorch semantics, conv bias included) ----
def reference(x_ncl, w_oik, bias, gamma, beta):
    y = lax.conv_general_dilated(
        x_ncl, w_oik, window_strides=(1,), padding=[(PAD, PAD)],
        rhs_dilation=(DIL,), dimension_numbers=("NCH", "OIH", "NCH"))
    y = y + bias.reshape(1, C_OUT, 1)
    mean = jnp.mean(y, axis=(0, 2), keepdims=True)
    var = jnp.mean((y - mean) ** 2, axis=(0, 2), keepdims=True)
    yhat = (y - mean) * lax.rsqrt(var + EPS)
    return yhat * gamma.reshape(1, C_OUT, 1) + beta.reshape(1, C_OUT, 1)


if __name__ == "__main__":
    key = jax.random.PRNGKey(0)
    kx, kw, kb, kg, kbt = jax.random.split(key, 5)

    # deterministic parameter init (synthetic; shapes from nn.Conv1d / BatchNorm1d)
    x = jax.random.uniform(kx, (N, C_IN, L), dtype=jnp.float32)              # NCL input
    w = jax.random.normal(kw, (C_OUT, C_IN, K), dtype=jnp.float32) * 0.2      # Conv1d weight
    b = jax.random.normal(kb, (C_OUT,), dtype=jnp.float32) * 0.1              # Conv1d bias
    gamma = 1.0 + 0.1 * jax.random.normal(kg, (C_OUT,), dtype=jnp.float32)    # BN weight
    beta = 0.1 * jax.random.normal(kbt, (C_OUT,), dtype=jnp.float32)          # BN bias

    out = one_d_conv_bn(x, w, b, gamma, beta)
    out = jax.block_until_ready(out)

    ref = reference(x, w, b, gamma, beta)
    np.testing.assert_allclose(np.asarray(out), np.asarray(ref),
                               rtol=1e-4, atol=1e-4)
    assert out.shape == (N, C_OUT, L_OUT)
    print("KERNEL_OK")
</pallas_src>

<mosaic_0001>
module attributes {stable_mosaic.version = 11 : i64} {
  func.func @fused_conv_bn_kernel(%arg0: memref<12x32xf32, #tpu.memory_space<vmem>>, %arg1: memref<8x12xf32, #tpu.memory_space<vmem>>, %arg2: memref<8x2xf32, #tpu.memory_space<vmem>>, %arg3: memref<8x32xf32, #tpu.memory_space<vmem>>) attributes {dimension_semantics = [], scalar_prefetch = 0 : i64, scratch_operands = 0 : i64, tpu.core_type = #tpu.core_type<tc>} {
    %c0 = arith.constant 0 : index
    %c0_0 = arith.constant 0 : index
    %0 = vector.load %arg1[%c0, %c0_0] : memref<8x12xf32, #tpu.memory_space<vmem>>, vector<8x12xf32>
    %c0_1 = arith.constant 0 : index
    %c0_2 = arith.constant 0 : index
    %1 = vector.load %arg0[%c0_1, %c0_2] : memref<12x32xf32, #tpu.memory_space<vmem>>, vector<12x32xf32>
    %cst = arith.constant dense<0.000000e+00> : vector<8x32xf32>
    %2 = tpu.matmul %0, %1, %cst {dimension_numbers = #tpu.dot_dimension_numbers<[1], [0], [0], [1], [0, 0, 1, 1], [], []>} : vector<8x12xf32>, vector<12x32xf32>, vector<8x32xf32> -> vector<8x32xf32>
    %cst_3 = arith.constant dense<0.000000e+00> : vector<8xf32>
    %3 = vector.multi_reduction <add>, %2, %cst_3 [1] : vector<8x32xf32> to vector<8xf32>
    %4 = vector.shape_cast %3 : vector<8xf32> to vector<8x1xf32>
    %cst_4 = arith.constant 3.125000e-02 : f32
    %5 = vector.broadcast %cst_4 : f32 to vector<8x1xf32>
    %6 = arith.mulf %4, %5 : vector<8x1xf32>
    %7 = vector.broadcast %6 : vector<8x1xf32> to vector<8x32xf32>
    %8 = arith.subf %2, %7 : vector<8x32xf32>
    %9 = arith.mulf %8, %8 : vector<8x32xf32>
    %cst_5 = arith.constant dense<0.000000e+00> : vector<8xf32>
    %10 = vector.multi_reduction <add>, %9, %cst_5 [1] : vector<8x32xf32> to vector<8xf32>
    %11 = vector.shape_cast %10 : vector<8xf32> to vector<8x1xf32>
    %cst_6 = arith.constant 3.125000e-02 : f32
    %12 = vector.broadcast %cst_6 : f32 to vector<8x1xf32>
    %13 = arith.mulf %11, %12 : vector<8x1xf32>
    %c0_7 = arith.constant 0 : index
    %c0_8 = arith.constant 0 : index
    %14 = vector.load %arg2[%c0_7, %c0_8] : memref<8x2xf32, #tpu.memory_space<vmem>>, vector<8x1xf32>
    %cst_9 = arith.constant 9.99999974E-6 : f32
    %15 = vector.broadcast %cst_9 : f32 to vector<8x1xf32>
    %16 = arith.addf %13, %15 : vector<8x1xf32>
    %17 = math.rsqrt %16 : vector<8x1xf32>
    %18 = arith.mulf %14, %17 : vector<8x1xf32>
    %19 = vector.broadcast %18 : vector<8x1xf32> to vector<8x32xf32>
    %20 = arith.mulf %8, %19 : vector<8x32xf32>
    %c0_10 = arith.constant 0 : index
    %c1 = arith.constant 1 : index
    %21 = vector.load %arg2[%c0_10, %c1] : memref<8x2xf32, #tpu.memory_space<vmem>>, vector<8x1xf32>
    %22 = vector.broadcast %21 : vector<8x1xf32> to vector<8x32xf32>
    %23 = arith.addf %20, %22 : vector<8x32xf32>
    %c0_11 = arith.constant 0 : index
    %c0_12 = arith.constant 0 : index
    %24 = vector.load %arg3[%c0_11, %c0_12] : memref<8x32xf32, #tpu.memory_space<vmem>>, vector<8x32xf32>
    tpu.vector_store %arg3[%c0_11, %c0_12], %23 {strides = array<i32>} : memref<8x32xf32, #tpu.memory_space<vmem>>, vector<8x32xf32>,
    return
  }
}

</mosaic_0001>

<llo_original>
// kernel: one_d_conv_bn.1
$region0: #{one_d_conv_bn.1}
  #allocation0 [shape = 'u32[]', space=smem, size = 0x4, offset = 0x4, fixed_abs, tag = 'smem constant byte address 0x4 - core index']
  #allocation1 [shape = 'u32[144,128]{1,0:T(1,128)}', space=vmem, size = 0x12000, scoped, tag = 'internal scratch']
  %s0 = inlined_call_operand.vmem [shape: f32[12,32], index: 0, kind: input, shape index: {}]
  %s1 = inlined_call_operand.vmem [shape: f32[8,12], index: 1, kind: input, shape index: {}]
  %s2 = inlined_call_operand.vmem [shape: f32[8,2], index: 2, kind: input, shape index: {}]
  %s3 = inlined_call_operand.vmem [shape: f32[8,32], index: 3, kind: output, shape index: {}]
  %s4 = sld [smem:[#allocation0]]
  $region22: #{one_d_conv_bn.1} parent=0
    _
  %s6 = ssub.s32 1, %s4
  %s7 = scalar_select 0, %s6, %s4
  // Predicated region
  $region2: #{one_d_conv_bn.1} parent=0 // pred_check
    _
  $region3: #{one_d_conv_bn.1} parent=0 // pred_check_branch
    %9 = sbr.rel (0) target = $region5
  $region4: #{one_d_conv_bn.1} parent=0 // pred_region
    _
  $region5: #{one_d_conv_bn.1} parent=0 // pred_fallthru
    _
  // Predicated region
  $region6: #{one_d_conv_bn.1} parent=0 // pred_check
    _
  $region7: #{one_d_conv_bn.1} parent=0 // pred_check_branch
    %11 = sbr.rel (0) target = $region9
  $region8: #{one_d_conv_bn.1} parent=0 // pred_region
    _
  $region9: #{one_d_conv_bn.1} parent=0 // pred_fallthru
    _
  // Predicated region
  $region10: #{one_d_conv_bn.1} parent=0 // pred_check
    _
  $region11: #{one_d_conv_bn.1} parent=0 // pred_check_branch
    %13 = sbr.rel (0) target = $region13
  $region12: #{one_d_conv_bn.1} parent=0 // pred_region
    _
  $region13: #{one_d_conv_bn.1} parent=0 // pred_fallthru
    _
  %v14 = vld [vmem:[%s1] sm:$0xff]
  %v15 = vld [vmem:[%s0] sm:$0xff]
  %v16 = vld [vmem:[%s0 + $0x8] sm:$0xf]
  %vm17 = vcmask 97280
  %v19 = vsel %vm17, %v14, 0
  %vm21 = vcmask 1043456
  %v23 = vsel %vm21, %v16, 0
  %25 = vmatprep.subr.mxu0 0.0
  %26 = vmatpush1.msra.mxu0 %v15
  %27 = vmatprep.subr.mxu0 0.0
  %28 = vmatpush1.msra.mxu0 %v23
  %29 = vmatprep.subr.mxu0 0.0
  %30 = vmatpush1.msra.mxu0 0.0
  %31 = vmatprep.subr.mxu0 0.0
  %32 = vmatpush1.msra.mxu0 0.0
  %33 = vmatprep.subr.mxu0 0.0
  %34 = vmatpush1.msra.mxu0 0.0
  %35 = vmatprep.subr.mxu0 0.0
  %36 = vmatpush1.msra.mxu0 0.0
  %37 = vmatprep.subr.mxu0 0.0
  %38 = vmatpush1.msra.mxu0 0.0
  %39 = vmatprep.subr.mxu0 0.0
  %40 = vmatpush1.msra.mxu0 0.0
  %41 = vmatprep.subr.mxu0 0.0
  %42 = vmatpush1.msra.mxu0 0.0
  %43 = vmatprep.subr.mxu0 0.0
  %44 = vmatpush1.msra.mxu0 0.0
  %45 = vmatprep.subr.mxu0 0.0
  %46 = vmatpush1.msra.mxu0 0.0
  %47 = vmatprep.subr.mxu0 0.0
  %48 = vmatpush1.msra.mxu0 0.0
  %49 = vmatprep.subr.mxu0 0.0
  %50 = vmatpush1.msra.mxu0 0.0
  %51 = vmatprep.subr.mxu0 0.0
  %52 = vmatpush1.msra.mxu0 0.0
  %53 = vmatprep.subr.mxu0 0.0
  %54 = vmatpush1.msra.mxu0 0.0
  %55 = vmatprep.subr.mxu0 0.0
  %56 = vmatpush1.msra.mxu0 0.0
  %57 = vmatprep.subr.mxu0 0.0
  %58 = vmatpush1.msra.mxu0 0.0
  %59 = vmatprep.subr.mxu0 0.0
  %60 = vmatpush1.msra.mxu0 0.0
  %61 = vmatprep.subr.mxu0 0.0
  %62 = vmatpush1.msra.mxu0 0.0
  %63 = vmatprep.subr.mxu0 0.0
  %64 = vmatpush1.msra.mxu0 0.0
  %65 = vmatprep.subr.mxu0 0.0
  %66 = vmatpush1.msra.mxu0 0.0
  %67 = vmatprep.subr.mxu0 0.0
  %68 = vmatpush1.msra.mxu0 0.0
  %69 = vmatprep.subr.mxu0 0.0
  %70 = vmatpush1.msra.mxu0 0.0
  %71 = vmatprep.subr.mxu0 0.0
  %72 = vmatpush1.msra.mxu0 0.0
  %73 = vmatprep.subr.mxu0 0.0
  %74 = vmatpush1.msra.mxu0 0.0
  %75 = vmatprep.subr.mxu0 0.0
  %76 = vmatpush1.msra.mxu0 0.0
  %77 = vmatprep.subr.mxu0 0.0
  %78 = vmatpush1.msra.mxu0 0.0
  %79 = vmatprep.subr.mxu0 0.0
  %80 = vmatpush1.msra.mxu0 0.0
  %81 = vmatprep.subr.mxu0 0.0
  %82 = vmatpush1.msra.mxu0 0.0
  %83 = vmatprep.subr.mxu0 0.0
  %84 = vmatpush1.msra.mxu0 0.0
  %85 = vmatprep.subr.mxu0 0.0
  %86 = vmatpush1.msra.mxu0 0.0
  %87 = vmatprep.subr.mxu0 0.0
  %88 = vmatpush1.msra.mxu0 0.0
  %89 = vmatprep.mubr.f32.mxu0 0.0
  %90 = vmatmul.mubr.f32.gmra.mrb[0].mxu0 %v19
  %v91 = vpop.f32.mrb[0].mxu0
  %v92 = vadd.f32 0.0, %v91
  %v93 = vpop.f32.mrb[0].mxu0
  %94 = vdwg.mxu0
  %vm95 = vcmask 261120
  %v96 = vsel %vm95, %v92, 0.0
  %97 = vadd.xlane.f32.xlu0 %v96
  %v98 = vpop.xlane.xlu0 %97
  %v99 = vmul.f32 %v98, 0.03125
  %v100 = vsub.f32 %v92, %v99
  %v101 = vmul.f32 %v100, %v100
  %v102 = vsel %vm95, %v101, 0.0
  %103 = vadd.xlane.f32.xlu0 %v102
  %v104 = vpop.xlane.xlu0 %103
  %v105 = vmul.f32 %v104, 0.03125
  %v106 = vld [vmem:[%s2] sm:$0xff]
  %v107 = vadd.f32 %v105, 1e-05
  %v108 = vrsqrt.pop %v107
  %v109 = vmul.f32 %v106, %v108
  %111 = vset.pattern.permute.xlu0 0
  %112 = vperm.xlu0 %111, %v109
  %v113 = vpop.permute.xlu0 %112
  %v115 = vmul.f32 %v100, %v113
  %117 = vset.pattern.permute.xlu0 1
  %118 = vperm.xlu0 %117, %v106
  %v119 = vpop.permute.xlu0 %118
  %v121 = vadd.f32 %v115, %v119
  %122 = vst.msk [vmem:[%s3] sm:$0xff] %vm95, %v121
  // Predicated region
  $region14: #{one_d_conv_bn.1} parent=0 // pred_check
    _
  $region15: #{one_d_conv_bn.1} parent=0 // pred_check_branch
    %124 = sbr.rel (0) target = $region17
  $region16: #{one_d_conv_bn.1} parent=0 // pred_region
    _
  $region17: #{one_d_conv_bn.1} parent=0 // pred_fallthru
    _
  // Predicated region
  $region18: #{one_d_conv_bn.1} parent=0 // pred_check
    _
  $region19: #{one_d_conv_bn.1} parent=0 // pred_check_branch
    %126 = sbr.rel (0) target = $region21
  $region20: #{one_d_conv_bn.1} parent=0 // pred_region
    _
  $region21: #{one_d_conv_bn.1} parent=0 // pred_fallthru
    _

</llo_original>
